<compile_context>
chip_gen: v6e
topology: v6e:2x2x1
jax: 0.10.0
libtpu: 0.0.40
codegen_flags: <defaults>
</compile_context>

<pallas_src>
import functools

import jax
import jax.numpy as jnp
from jax.experimental import pallas as pl
from jax.experimental.pallas import tpu as pltpu


def mlp_dw_kernel(x_ref, w1_ref, w2_ref, b_ref, o_ref):
    """One grid step == one batch tile of the fused fc1 -> ReLU -> fc2 MLP.

    x_ref : (bm, D)   batch tile of the input
    w1_ref: (D, D)    fc1 weight, transposed to [in, out] (VMEM-resident)
    w2_ref: (D, D)    fc2 weight, transposed to [in, out] (VMEM-resident)
    b_ref : (2, D)    packed biases: row 0 = fc1 bias, row 1 = fc2 bias
    o_ref : (bm, D)   batch tile of the output (written once)
    """
    x = x_ref[...]
    # fc1: x @ W1 + b1   (f32 accumulation on the MXU)
    h = jnp.dot(x, w1_ref[...], preferred_element_type=jnp.float32) + b_ref[0:1, :]
    # ReLU
    h = jnp.maximum(h, 0.0)
    # fc2: h @ W2 + b2
    y = (
        jnp.dot(h.astype(w2_ref.dtype), w2_ref[...], preferred_element_type=jnp.float32)
        + b_ref[1:2, :]
    )
    o_ref[...] = y.astype(o_ref.dtype)


def _round_up(x, m):
    return (x + m - 1) // m * m


@functools.partial(jax.jit, static_argnames=("block_m",))
def mlp_dw_forward(x, w1_t, w2_t, b_packed, *, block_m=256):
    """x: [B, D]; w1_t/w2_t: [D, D] ([in, out]); b_packed: [2, D]."""
    B, D = x.shape
    itemsize = jnp.dtype(x.dtype).itemsize

    # Batch (M) tile: as large as possible up to block_m, sublane-aligned (8).
    bm = min(block_m, _round_up(B, 8))
    Bp = _round_up(B, bm)
    if Bp != B:
        x = jnp.pad(x, ((0, Bp - B), (0, 0)))

    grid = (Bp // bm,)

    # VMEM budget: resident weights/bias (single-buffered, constant index_map)
    # + double-buffered x/out tiles + f32 intermediates, with headroom.
    vmem_bytes = (2 * D * D + 2 * D) * itemsize + 4 * bm * D * itemsize + 3 * bm * D * 4
    vmem_bytes = min(max(int(vmem_bytes * 1.5), 1 << 20), 100 * (1 << 20))

    cost = pl.CostEstimate(
        flops=2 * 2 * Bp * D * D,
        transcendentals=0,
        bytes_accessed=(2 * Bp * D + 2 * D * D + 2 * D) * itemsize,
    )

    out = pl.pallas_call(
        mlp_dw_kernel,
        out_shape=jax.ShapeDtypeStruct((Bp, D), x.dtype),
        grid_spec=pltpu.PrefetchScalarGridSpec(
            num_scalar_prefetch=0,
            grid=grid,
            in_specs=[
                pl.BlockSpec((bm, D), lambda i: (i, 0)),  # x batch tile
                pl.BlockSpec((D, D), lambda i: (0, 0)),   # w1 (resident across tiles)
                pl.BlockSpec((D, D), lambda i: (0, 0)),   # w2 (resident across tiles)
                pl.BlockSpec((2, D), lambda i: (0, 0)),   # packed biases (resident)
            ],
            out_specs=pl.BlockSpec((bm, D), lambda i: (i, 0)),
        ),
        compiler_params=pltpu.CompilerParams(
            # Batch tiles are independent -> allow megacore sharding.
            dimension_semantics=("parallel",),
            vmem_limit_bytes=vmem_bytes,
        ),
        cost_estimate=cost,
    )(x, w1_t, w2_t, b_packed)

    return out[:B] if Bp != B else out


def init_mlp_dw_params(key, d_hid):
    """Deterministic init mimicking the module: uniform(-0.01, 0.01) everywhere.

    Weights are kept in PyTorch's [out, in] layout here; the caller transposes.
    """
    k1, k2, k3, k4 = jax.random.split(key, 4)
    fc1_w = jax.random.uniform(k1, (d_hid, d_hid), jnp.float32, -0.01, 0.01)
    fc1_b = jax.random.uniform(k2, (d_hid,), jnp.float32, -0.01, 0.01)
    fc2_w = jax.random.uniform(k3, (d_hid, d_hid), jnp.float32, -0.01, 0.01)
    fc2_b = jax.random.uniform(k4, (d_hid,), jnp.float32, -0.01, 0.01)
    return fc1_w, fc1_b, fc2_w, fc2_b


def mlp_dw_reference(x, fc1_w, fc1_b, fc2_w, fc2_b):
    """Plain-JAX reference of the PyTorch forward (x.mm(W.t()) + b)."""
    h = jnp.maximum(x @ fc1_w.T + fc1_b, 0.0)
    return h @ fc2_w.T + fc2_b


if __name__ == "__main__":
    d_hid = 128   # hidden dim (lane-aligned)
    batch = 64    # small batch; wrapper tiles up to 256-row batch tiles

    key = jax.random.PRNGKey(0)
    k_x, k_p = jax.random.split(key)
    x = jax.random.normal(k_x, (batch, d_hid), jnp.float32)
    fc1_w, fc1_b, fc2_w, fc2_b = init_mlp_dw_params(k_p, d_hid)

    # Pre-transpose weights to [in, out] and pack biases into one (2, D) array
    # so each grid step needs a single small bias DMA.
    w1_t = fc1_w.T
    w2_t = fc2_w.T
    b_packed = jnp.stack([fc1_b, fc2_b], axis=0)  # (2, D)

    out = mlp_dw_forward(x, w1_t, w2_t, b_packed)
    out = jax.block_until_ready(out)

    ref = mlp_dw_reference(x, fc1_w, fc1_b, fc2_w, fc2_b)
    assert out.shape == (batch, d_hid)
    assert jnp.allclose(out, ref, atol=1e-5, rtol=1e-5), "mismatch vs reference"

    print("KERNEL_OK")
</pallas_src>

<mosaic_0001>
module attributes {stable_mosaic.version = 11 : i64} {
  func.func @mlp_dw_kernel(%arg0: i32, %arg1: memref<64x128xf32, #tpu.memory_space<vmem>>, %arg2: memref<128x128xf32, #tpu.memory_space<vmem>>, %arg3: memref<128x128xf32, #tpu.memory_space<vmem>>, %arg4: memref<2x128xf32, #tpu.memory_space<vmem>>, %arg5: memref<64x128xf32, #tpu.memory_space<vmem>>) attributes {dimension_semantics = [#tpu.dimension_semantics<parallel>], iteration_bounds = array<i64: 1>, scalar_prefetch = 0 : i64, scratch_operands = 0 : i64, tpu.core_type = #tpu.core_type<tc>, window_params = [{transform_indices = @transform_0, window_bounds = array<i64: 64, 128>}, {pipeline_mode = #tpu.pipeline_mode<synchronous>, transform_indices = @transform_1, window_bounds = array<i64: 128, 128>}, {pipeline_mode = #tpu.pipeline_mode<synchronous>, transform_indices = @transform_2, window_bounds = array<i64: 128, 128>}, {pipeline_mode = #tpu.pipeline_mode<synchronous>, transform_indices = @transform_3, window_bounds = array<i64: 2, 128>}, {transform_indices = @transform_4, window_bounds = array<i64: 64, 128>}]} {
    %c0 = arith.constant 0 : index
    %c0_0 = arith.constant 0 : index
    %0 = vector.load %arg1[%c0, %c0_0] : memref<64x128xf32, #tpu.memory_space<vmem>>, vector<64x128xf32>
    %c0_1 = arith.constant 0 : index
    %c0_2 = arith.constant 0 : index
    %1 = vector.load %arg2[%c0_1, %c0_2] : memref<128x128xf32, #tpu.memory_space<vmem>>, vector<128x128xf32>
    %cst = arith.constant dense<0.000000e+00> : vector<64x128xf32>
    %2 = tpu.matmul %0, %1, %cst {dimension_numbers = #tpu.dot_dimension_numbers<[1], [0], [0], [1], [0, 0, 1, 1], [], []>} : vector<64x128xf32>, vector<128x128xf32>, vector<64x128xf32> -> vector<64x128xf32>
    %c0_3 = arith.constant 0 : index
    %c0_4 = arith.constant 0 : index
    %3 = vector.load %arg4[%c0_3, %c0_4] : memref<2x128xf32, #tpu.memory_space<vmem>>, vector<1x128xf32>
    %4 = vector.broadcast %3 : vector<1x128xf32> to vector<64x128xf32>
    %5 = arith.addf %2, %4 : vector<64x128xf32>
    %cst_5 = arith.constant 0.000000e+00 : f32
    %6 = vector.broadcast %cst_5 : f32 to vector<64x128xf32>
    %7 = arith.maximumf %5, %6 : vector<64x128xf32>
    %c0_6 = arith.constant 0 : index
    %c0_7 = arith.constant 0 : index
    %8 = vector.load %arg3[%c0_6, %c0_7] : memref<128x128xf32, #tpu.memory_space<vmem>>, vector<128x128xf32>
    %cst_8 = arith.constant dense<0.000000e+00> : vector<64x128xf32>
    %9 = tpu.matmul %7, %8, %cst_8 {dimension_numbers = #tpu.dot_dimension_numbers<[1], [0], [0], [1], [0, 0, 1, 1], [], []>} : vector<64x128xf32>, vector<128x128xf32>, vector<64x128xf32> -> vector<64x128xf32>
    %c1 = arith.constant 1 : index
    %c0_9 = arith.constant 0 : index
    %10 = vector.load %arg4[%c1, %c0_9] : memref<2x128xf32, #tpu.memory_space<vmem>>, vector<1x128xf32>
    %11 = vector.broadcast %10 : vector<1x128xf32> to vector<64x128xf32>
    %12 = arith.addf %9, %11 : vector<64x128xf32>
    %c0_10 = arith.constant 0 : index
    %c0_11 = arith.constant 0 : index
    %13 = vector.load %arg5[%c0_10, %c0_11] : memref<64x128xf32, #tpu.memory_space<vmem>>, vector<64x128xf32>
    tpu.vector_store %arg5[%c0_10, %c0_11], %12 {strides = array<i32>} : memref<64x128xf32, #tpu.memory_space<vmem>>, vector<64x128xf32>,
    return
  }
  func.func @transform_0(%arg0: i32) -> (i32, i32) {
    %c0_i32 = arith.constant 0 : i32
    %c0_i32_0 = arith.constant 0 : i32
    return %arg0, %c0_i32 : i32, i32
  }
  func.func @transform_1(%arg0: i32) -> (i32, i32) {
    %c0_i32 = arith.constant 0 : i32
    %c0_i32_0 = arith.constant 0 : i32
    %c0_i32_1 = arith.constant 0 : i32
    return %c0_i32, %c0_i32_0 : i32, i32
  }
  func.func @transform_2(%arg0: i32) -> (i32, i32) {
    %c0_i32 = arith.constant 0 : i32
    %c0_i32_0 = arith.constant 0 : i32
    %c0_i32_1 = arith.constant 0 : i32
    return %c0_i32, %c0_i32_0 : i32, i32
  }
  func.func @transform_3(%arg0: i32) -> (i32, i32) {
    %c0_i32 = arith.constant 0 : i32
    %c0_i32_0 = arith.constant 0 : i32
    %c0_i32_1 = arith.constant 0 : i32
    return %c0_i32, %c0_i32_0 : i32, i32
  }
  func.func @transform_4(%arg0: i32) -> (i32, i32) {
    %c0_i32 = arith.constant 0 : i32
    %c0_i32_0 = arith.constant 0 : i32
    return %arg0, %c0_i32 : i32, i32
  }
}

</mosaic_0001>

<llo_original>
// kernel: mlp_dw_forward.1
$region0: #{mlp_dw_forward.1}
  #allocation0 [shape = 'u32[]', space=smem, size = 0x4, offset = 0x4, fixed_abs, tag = 'smem constant byte address 0x4 - core index']
  #allocation1 [shape = 'u32[144,128]{1,0:T(1,128)}', space=vmem, size = 0x12000, scoped, tag = 'internal scratch']
  %s0 = inlined_call_operand.hbm [shape: f32[64,128], index: 0, kind: input, shape index: {}]
  %s1 = inlined_call_operand.hbm [shape: f32[128,128], index: 1, kind: input, shape index: {}]
  %s2 = inlined_call_operand.hbm [shape: f32[128,128], index: 2, kind: input, shape index: {}]
  %s3 = inlined_call_operand.vmem [shape: f32[2,128], index: 3, kind: input, shape index: {}]
  %s4 = inlined_call_operand.hbm [shape: f32[64,128], index: 4, kind: output, shape index: {}]
  %s5 = sld [smem:[#allocation0]]
  $region38: #{mlp_dw_forward.1} parent=0
    _
  %s7 = ssub.s32 1, %s5
  %s8 = scalar_select 0, %s7, %s5
  $region1: #{mlp_dw_forward.1} parent=0
    #allocation2 [shape = 'u8[32768]{0}', space=vmem, size = 0x8000, scoped, tag = 'input window, operand 0, single buffered']
    #allocation3 [shape = 's32[1]{0}', space=sflag, size = 0x4, scoped, tag = 'scoped memory for mlp_dw_forward.1']
    #allocation4 [shape = 's32[1]{0}', space=sflag, size = 0x4, scoped, tag = 'scoped memory for mlp_dw_forward.1']
    #allocation5 [shape = 'u8[65536]{0}', space=vmem, size = 0x10000, scoped, tag = 'input window, operand 1, single buffered']
    #allocation6 [shape = 's32[1]{0}', space=sflag, size = 0x4, scoped, tag = 'scoped memory for mlp_dw_forward.1']
    #allocation7 [shape = 'u8[65536]{0}', space=vmem, size = 0x10000, scoped, tag = 'input window, operand 2, single buffered']
    #allocation8 [shape = 'u8[32768]{0}', space=vmem, size = 0x8000, scoped, tag = 'output window, operand 0, single buffered']
    %9 = vsyncpa [#allocation3], 0
    %10 = vsyncpa [#allocation6], 0
    %11 = vsyncpa [#allocation4], 0
    // Predicated region
    $region2: #{mlp_dw_forward.1} parent=1 // pred_check
      _
    $region3: #{mlp_dw_forward.1} parent=1 // pred_check_branch
      %13 = sbr.rel (0) target = $region5
    $region4: #{mlp_dw_forward.1} parent=1 // pred_region
      %s15 = ssub.s32 1024, 1024
      %16 = vsyncadd [#allocation3], %s15
      %s17 = sshll.u32 [#allocation2], 4
      %s18 = int_to_ptr.vmem [resolvable:$true] %s17
      %23 = dma.hbm_to_vmem [thread:$0]  %s0, 1024, %s18, [#allocation3], 128, 128, 8
    $region5: #{mlp_dw_forward.1} parent=1 // pred_fallthru
      _
    // Predicated region
    $region6: #{mlp_dw_forward.1} parent=1 // pred_check
      _
    $region7: #{mlp_dw_forward.1} parent=1 // pred_check_branch
      %25 = sbr.rel (0) target = $region9
    $region8: #{mlp_dw_forward.1} parent=1 // pred_region
      %s27 = ssub.s32 2048, 2048
      %28 = vsyncadd [#allocation6], %s27
      %s29 = sshll.u32 [#allocation5], 4
      %s30 = int_to_ptr.vmem [resolvable:$true] %s29
      %35 = dma.hbm_to_vmem [thread:$0]  %s1, 2048, %s30, [#allocation6], 128, 128, 8
    $region9: #{mlp_dw_forward.1} parent=1 // pred_fallthru
      _
    // Predicated region
    $region10: #{mlp_dw_forward.1} parent=1 // pred_check
      _
    $region11: #{mlp_dw_forward.1} parent=1 // pred_check_branch
      %37 = sbr.rel (0) target = $region13
    $region12: #{mlp_dw_forward.1} parent=1 // pred_region
      %s39 = ssub.s32 2048, 2048
      %40 = vsyncadd [#allocation6], %s39
      %s41 = sshll.u32 [#allocation7], 4
      %s42 = int_to_ptr.vmem [resolvable:$true] %s41
      %47 = dma.hbm_to_vmem [thread:$0]  %s2, 2048, %s42, [#allocation6], 128, 128, 8
    $region13: #{mlp_dw_forward.1} parent=1 // pred_fallthru
      _
    // Predicated region
    $region14: #{mlp_dw_forward.1} parent=1 // pred_check
      _
    $region15: #{mlp_dw_forward.1} parent=1 // pred_check_branch
      %49 = sbr.rel (0) target = $region17
    $region16: #{mlp_dw_forward.1} parent=1 // pred_region
      _
    $region17: #{mlp_dw_forward.1} parent=1 // pred_fallthru
      _
    // Predicated region
    $region18: #{mlp_dw_forward.1} parent=1 // pred_check
      _
    $region19: #{mlp_dw_forward.1} parent=1 // pred_check_branch
      %51 = sbr.rel (0) target = $region21
    $region20: #{mlp_dw_forward.1} parent=1 // pred_region
      %52 = dma.done [#allocation3], 1024
    $region21: #{mlp_dw_forward.1} parent=1 // pred_fallthru
      _
    // Predicated region
    $region22: #{mlp_dw_forward.1} parent=1 // pred_check
      _
    $region23: #{mlp_dw_forward.1} parent=1 // pred_check_branch
      %54 = sbr.rel (0) target = $region25
    $region24: #{mlp_dw_forward.1} parent=1 // pred_region
      %55 = dma.done [#allocation6], 2048
    $region25: #{mlp_dw_forward.1} parent=1 // pred_fallthru
      _
    // Predicated region
    $region26: #{mlp_dw_forward.1} parent=1 // pred_check
      _
    $region27: #{mlp_dw_forward.1} parent=1 // pred_check_branch
      %57 = sbr.rel (0) target = $region29
    $region28: #{mlp_dw_forward.1} parent=1 // pred_region
      %58 = dma.done [#allocation6], 2048
    $region29: #{mlp_dw_forward.1} parent=1 // pred_fallthru
      _
    %v59 = vld [vmem:[#allocation2] sm:$0xff]
    %v60 = vld [vmem:[#allocation2 + $0x8] sm:$0xff]
    %v61 = vld [vmem:[#allocation2 + $0x10] sm:$0xff]
    %v62 = vld [vmem:[#allocation2 + $0x18] sm:$0xff]
    %v63 = vld [vmem:[#allocation2 + $0x20] sm:$0xff]
    %v64 = vld [vmem:[#allocation2 + $0x28] sm:$0xff]
    %v65 = vld [vmem:[#allocation2 + $0x30] sm:$0xff]
    %v66 = vld [vmem:[#allocation2 + $0x38] sm:$0xff]
    %v67 = vld [vmem:[#allocation5] sm:$0xff]
    %v68 = vld [vmem:[#allocation5 + $0x8] sm:$0xff]
    %v69 = vld [vmem:[#allocation5 + $0x10] sm:$0xff]
    %v70 = vld [vmem:[#allocation5 + $0x18] sm:$0xff]
    %v71 = vld [vmem:[#allocation5 + $0x20] sm:$0xff]
    %v72 = vld [vmem:[#allocation5 + $0x28] sm:$0xff]
    %v73 = vld [vmem:[#allocation5 + $0x30] sm:$0xff]
    %v74 = vld [vmem:[#allocation5 + $0x38] sm:$0xff]
    %v75 = vld [vmem:[#allocation5 + $0x40] sm:$0xff]
    %v76 = vld [vmem:[#allocation5 + $0x48] sm:$0xff]
    %v77 = vld [vmem:[#allocation5 + $0x50] sm:$0xff]
    %v78 = vld [vmem:[#allocation5 + $0x58] sm:$0xff]
    %v79 = vld [vmem:[#allocation5 + $0x60] sm:$0xff]
    %v80 = vld [vmem:[#allocation5 + $0x68] sm:$0xff]
    %v81 = vld [vmem:[#allocation5 + $0x70] sm:$0xff]
    %v82 = vld [vmem:[#allocation5 + $0x78] sm:$0xff]
    %v83 = vld [vmem:[%s3] sm:$0x1]
    %v84 = vlaneseq
    %v85 = vshrl.u32 %v84, 7
    %v86 = vsub.s32 0, %v85
    %v87 = vrot.slane %v83, %v86
    %88 = vmatprep.subr.mxu0 0.0
    %89 = vmatpush1.msra.mxu0 %v82
    %90 = vmatprep.subr.mxu0 0.0
    %91 = vmatpush1.msra.mxu0 %v81
    %92 = vmatprep.subr.mxu0 0.0
    %93 = vmatpush1.msra.mxu0 %v80
    %94 = vmatprep.subr.mxu0 0.0
    %95 = vmatpush1.msra.mxu0 %v79
    %96 = vmatprep.subr.mxu0 0.0
    %97 = vmatpush1.msra.mxu0 %v78
    %98 = vmatprep.subr.mxu0 0.0
    %99 = vmatpush1.msra.mxu0 %v77
    %100 = vmatprep.subr.mxu0 0.0
    %101 = vmatpush1.msra.mxu0 %v76
    %102 = vmatprep.subr.mxu0 0.0
    %103 = vmatpush1.msra.mxu0 %v75
    %104 = vmatprep.subr.mxu0 0.0
    %105 = vmatpush1.msra.mxu0 %v74
    %106 = vmatprep.subr.mxu0 0.0
    %107 = vmatpush1.msra.mxu0 %v73
    %108 = vmatprep.subr.mxu0 0.0
    %109 = vmatpush1.msra.mxu0 %v72
    %110 = vmatprep.subr.mxu0 0.0
    %111 = vmatpush1.msra.mxu0 %v71
    %112 = vmatprep.subr.mxu0 0.0
    %113 = vmatpush1.msra.mxu0 %v70
    %114 = vmatprep.subr.mxu0 0.0
    %115 = vmatpush1.msra.mxu0 %v69
    %116 = vmatprep.subr.mxu0 0.0
    %117 = vmatpush1.msra.mxu0 %v68
    %118 = vmatprep.subr.mxu0 0.0
    %119 = vmatpush1.msra.mxu0 %v67
    %120 = vmatprep.subr.mxu0 0.0
    %121 = vmatpush2.msra.mxu0 0.0
    %122 = vmatprep.subr.mxu0 0.0
    %123 = vmatpush2.msra.mxu0 0.0
    %124 = vmatprep.subr.mxu0 0.0
    %125 = vmatpush2.msra.mxu0 0.0
    %126 = vmatprep.subr.mxu0 0.0
    %127 = vmatpush2.msra.mxu0 0.0
    %128 = vmatprep.subr.mxu0 0.0
    %129 = vmatpush2.msra.mxu0 0.0
    %130 = vmatprep.subr.mxu0 0.0
    %131 = vmatpush2.msra.mxu0 0.0
    %132 = vmatprep.subr.mxu0 0.0
    %133 = vmatpush2.msra.mxu0 0.0
    %134 = vmatprep.subr.mxu0 0.0
    %135 = vmatpush2.msra.mxu0 0.0
    %136 = vmatprep.subr.mxu0 0.0
    %137 = vmatpush2.msra.mxu0 0.0
    %138 = vmatprep.subr.mxu0 0.0
    %139 = vmatpush2.msra.mxu0 0.0
    %140 = vmatprep.subr.mxu0 0.0
    %141 = vmatpush2.msra.mxu0 0.0
    %142 = vmatprep.subr.mxu0 0.0
    %143 = vmatpush2.msra.mxu0 0.0
    %144 = vmatprep.subr.mxu0 0.0
    %145 = vmatpush2.msra.mxu0 0.0
    %146 = vmatprep.subr.mxu0 0.0
    %147 = vmatpush2.msra.mxu0 0.0
    %148 = vmatprep.subr.mxu0 0.0
    %149 = vmatpush2.msra.mxu0 0.0
    %150 = vmatprep.subr.mxu0 0.0
    %151 = vmatpush2.msra.mxu0 0.0
    %152 = vmatprep.mubr.f32.mxu0 0.0
    %153 = vmatmul.mubr.f32.gmra.mxu0 %v59
    %v154 = vpop.f32.mrf.mxu0
    %v155 = vadd.f32 %v87, %v154
    %v156 = vpop.f32.mrf.mxu0
    %157 = vmatprep.mubr.f32.mxu0 0.0
    %158 = vmatmul.mubr.f32.gmra.mxu0 %v60
    %v159 = vpop.f32.mrf.mxu0
    %v160 = vadd.f32 %v87, %v159
    %v161 = vpop.f32.mrf.mxu0
    %162 = vmatprep.mubr.f32.mxu0 0.0
    %163 = vmatmul.mubr.f32.gmra.mxu0 %v61
    %v164 = vpop.f32.mrf.mxu0
    %v165 = vadd.f32 %v87, %v164
    %v166 = vpop.f32.mrf.mxu0
    %167 = vmatprep.mubr.f32.mxu0 0.0
    %168 = vmatmul.mubr.f32.gmra.mxu0 %v62
    %v169 = vpop.f32.mrf.mxu0
    %v170 = vadd.f32 %v87, %v169
    %v171 = vpop.f32.mrf.mxu0
    %172 = vmatprep.mubr.f32.mxu0 0.0
    %173 = vmatmul.mubr.f32.gmra.mxu0 %v63
    %v174 = vpop.f32.mrf.mxu0
    %v175 = vadd.f32 %v87, %v174
    %v176 = vpop.f32.mrf.mxu0
    %177 = vmatprep.mubr.f32.mxu0 0.0
    %178 = vmatmul.mubr.f32.gmra.mxu0 %v64
    %v179 = vpop.f32.mrf.mxu0
    %v180 = vadd.f32 %v87, %v179
    %v181 = vpop.f32.mrf.mxu0
    %182 = vmatprep.mubr.f32.mxu0 0.0
    %183 = vmatmul.mubr.f32.gmra.mxu0 %v65
    %v184 = vpop.f32.mrf.mxu0
    %v185 = vadd.f32 %v87, %v184
    %v186 = vpop.f32.mrf.mxu0
    %187 = vmatprep.mubr.f32.mxu0 0.0
    %188 = vmatmul.mubr.f32.gmra.mxu0 %v66
    %v189 = vpop.f32.mrf.mxu0
    %v190 = vadd.f32 %v87, %v189
    %v191 = vpop.f32.mrf.mxu0
    %192 = vdwg.mxu0
    %v193 = vmax.f32 %v155, 0.0
    %v194 = vmax.f32 %v160, 0.0
    %v195 = vmax.f32 %v165, 0.0
    %v196 = vmax.f32 %v170, 0.0
    %v197 = vmax.f32 %v175, 0.0
    %v198 = vmax.f32 %v180, 0.0
    %v199 = vmax.f32 %v185, 0.0
    %v200 = vmax.f32 %v190, 0.0
    %v201 = vld [vmem:[#allocation7] sm:$0xff]
    %v202 = vld [vmem:[#allocation7 + $0x8] sm:$0xff]
    %v203 = vld [vmem:[#allocation7 + $0x10] sm:$0xff]
    %v204 = vld [vmem:[#allocation7 + $0x18] sm:$0xff]
    %v205 = vld [vmem:[#allocation7 + $0x20] sm:$0xff]
    %v206 = vld [vmem:[#allocation7 + $0x28] sm:$0xff]
    %v207 = vld [vmem:[#allocation7 + $0x30] sm:$0xff]
    %v208 = vld [vmem:[#allocation7 + $0x38] sm:$0xff]
    %v209 = vld [vmem:[#allocation7 + $0x40] sm:$0xff]
    %v210 = vld [vmem:[#allocation7 + $0x48] sm:$0xff]
    %v211 = vld [vmem:[#allocation7 + $0x50] sm:$0xff]
    %v212 = vld [vmem:[#allocation7 + $0x58] sm:$0xff]
    %v213 = vld [vmem:[#allocation7 + $0x60] sm:$0xff]
    %v214 = vld [vmem:[#allocation7 + $0x68] sm:$0xff]
    %v215 = vld [vmem:[#allocation7 + $0x70] sm:$0xff]
    %v216 = vld [vmem:[#allocation7 + $0x78] sm:$0xff]
    %v217 = vld [vmem:[%s3 + $0x1] sm:$0x1]
    %v218 = vlaneseq
    %v219 = vshrl.u32 %v218, 7
    %v220 = vsub.s32 0, %v219
    %v221 = vrot.slane %v217, %v220
    %222 = vmatprep.subr.mxu0 0.0
    %223 = vmatpush1.msra.mxu0 %v216
    %224 = vmatprep.subr.mxu0 0.0
    %225 = vmatpush1.msra.mxu0 %v215
    %226 = vmatprep.subr.mxu0 0.0
    %227 = vmatpush1.msra.mxu0 %v214
    %228 = vmatprep.subr.mxu0 0.0
    %229 = vmatpush1.msra.mxu0 %v213
    %230 = vmatprep.subr.mxu0 0.0
    %231 = vmatpush1.msra.mxu0 %v212
    %232 = vmatprep.subr.mxu0 0.0
    %233 = vmatpush1.msra.mxu0 %v211
    %234 = vmatprep.subr.mxu0 0.0
    %235 = vmatpush1.msra.mxu0 %v210
    %236 = vmatprep.subr.mxu0 0.0
    %237 = vmatpush1.msra.mxu0 %v209
    %238 = vmatprep.subr.mxu0 0.0
    %239 = vmatpush1.msra.mxu0 %v208
    %240 = vmatprep.subr.mxu0 0.0
    %241 = vmatpush1.msra.mxu0 %v207
    %242 = vmatprep.subr.mxu0 0.0
    %243 = vmatpush1.msra.mxu0 %v206
    %244 = vmatprep.subr.mxu0 0.0
    %245 = vmatpush1.msra.mxu0 %v205
    %246 = vmatprep.subr.mxu0 0.0
    %247 = vmatpush1.msra.mxu0 %v204
    %248 = vmatprep.subr.mxu0 0.0
    %249 = vmatpush1.msra.mxu0 %v203
    %250 = vmatprep.subr.mxu0 0.0
    %251 = vmatpush1.msra.mxu0 %v202
    %252 = vmatprep.subr.mxu0 0.0
    %253 = vmatpush1.msra.mxu0 %v201
    %254 = vmatprep.subr.mxu0 0.0
    %255 = vmatpush2.msra.mxu0 0.0
    %256 = vmatprep.subr.mxu0 0.0
    %257 = vmatpush2.msra.mxu0 0.0
    %258 = vmatprep.subr.mxu0 0.0
    %259 = vmatpush2.msra.mxu0 0.0
    %260 = vmatprep.subr.mxu0 0.0
    %261 = vmatpush2.msra.mxu0 0.0
    %262 = vmatprep.subr.mxu0 0.0
    %263 = vmatpush2.msra.mxu0 0.0
    %264 = vmatprep.subr.mxu0 0.0
    %265 = vmatpush2.msra.mxu0 0.0
    %266 = vmatprep.subr.mxu0 0.0
    %267 = vmatpush2.msra.mxu0 0.0
    %268 = vmatprep.subr.mxu0 0.0
    %269 = vmatpush2.msra.mxu0 0.0
    %270 = vmatprep.subr.mxu0 0.0
    %271 = vmatpush2.msra.mxu0 0.0
    %272 = vmatprep.subr.mxu0 0.0
    %273 = vmatpush2.msra.mxu0 0.0
    %274 = vmatprep.subr.mxu0 0.0
    %275 = vmatpush2.msra.mxu0 0.0
    %276 = vmatprep.subr.mxu0 0.0
    %277 = vmatpush2.msra.mxu0 0.0
    %278 = vmatprep.subr.mxu0 0.0
    %279 = vmatpush2.msra.mxu0 0.0
    %280 = vmatprep.subr.mxu0 0.0
    %281 = vmatpush2.msra.mxu0 0.0
    %282 = vmatprep.subr.mxu0 0.0
    %283 = vmatpush2.msra.mxu0 0.0
    %284 = vmatprep.subr.mxu0 0.0
    %285 = vmatpush2.msra.mxu0 0.0
    %286 = vmatprep.mubr.f32.mxu0 0.0
    %287 = vmatmul.mubr.f32.gmra.mxu0 %v193
    %v288 = vpop.f32.mrf.mxu0
    %v289 = vadd.f32 %v221, %v288
    %v290 = vpop.f32.mrf.mxu0
    %291 = vmatprep.mubr.f32.mxu0 0.0
    %292 = vmatmul.mubr.f32.gmra.mxu0 %v194
    %v293 = vpop.f32.mrf.mxu0
    %v294 = vadd.f32 %v221, %v293
    %v295 = vpop.f32.mrf.mxu0
    %296 = vmatprep.mubr.f32.mxu0 0.0
    %297 = vmatmul.mubr.f32.gmra.mxu0 %v195
    %v298 = vpop.f32.mrf.mxu0
    %v299 = vadd.f32 %v221, %v298
    %v300 = vpop.f32.mrf.mxu0
    %301 = vmatprep.mubr.f32.mxu0 0.0
    %302 = vmatmul.mubr.f32.gmra.mxu0 %v196
    %v303 = vpop.f32.mrf.mxu0
    %v304 = vadd.f32 %v221, %v303
    %v305 = vpop.f32.mrf.mxu0
    %306 = vmatprep.mubr.f32.mxu0 0.0
    %307 = vmatmul.mubr.f32.gmra.mxu0 %v197
    %v308 = vpop.f32.mrf.mxu0
    %v309 = vadd.f32 %v221, %v308
    %v310 = vpop.f32.mrf.mxu0
    %311 = vmatprep.mubr.f32.mxu0 0.0
    %312 = vmatmul.mubr.f32.gmra.mxu0 %v198
    %v313 = vpop.f32.mrf.mxu0
    %v314 = vadd.f32 %v221, %v313
    %v315 = vpop.f32.mrf.mxu0
    %316 = vmatprep.mubr.f32.mxu0 0.0
    %317 = vmatmul.mubr.f32.gmra.mxu0 %v199
    %v318 = vpop.f32.mrf.mxu0
    %v319 = vadd.f32 %v221, %v318
    %v320 = vpop.f32.mrf.mxu0
    %321 = vmatprep.mubr.f32.mxu0 0.0
    %322 = vmatmul.mubr.f32.gmra.mxu0 %v200
    %v323 = vpop.f32.mrf.mxu0
    %v324 = vadd.f32 %v221, %v323
    %v325 = vpop.f32.mrf.mxu0
    %326 = vdwg.mxu0
    %327 = vst [vmem:[#allocation8] sm:$0xff] %v289
    %328 = vst [vmem:[#allocation8 + $0x8] sm:$0xff] %v294
    %329 = vst [vmem:[#allocation8 + $0x10] sm:$0xff] %v299
    %330 = vst [vmem:[#allocation8 + $0x18] sm:$0xff] %v304
    %331 = vst [vmem:[#allocation8 + $0x20] sm:$0xff] %v309
    %332 = vst [vmem:[#allocation8 + $0x28] sm:$0xff] %v314
    %333 = vst [vmem:[#allocation8 + $0x30] sm:$0xff] %v319
    %334 = vst [vmem:[#allocation8 + $0x38] sm:$0xff] %v324
    // Predicated region
    $region30: #{mlp_dw_forward.1} parent=1 // pred_check
      _
    $region31: #{mlp_dw_forward.1} parent=1 // pred_check_branch
      %336 = sbr.rel (0) target = $region33
    $region32: #{mlp_dw_forward.1} parent=1 // pred_region
      %s338 = ssub.s32 1024, 1024
      %339 = vsyncadd [#allocation4], %s338
      %s340 = sshll.u32 [#allocation8], 4
      %s341 = int_to_ptr.vmem [resolvable:$true] %s340
      %346 = dma.vmem_to_hbm [thread:$0]  %s341, 1024, %s4, [#allocation4], 128, 128, 8
    $region33: #{mlp_dw_forward.1} parent=1 // pred_fallthru
      _
    // Predicated region
    $region34: #{mlp_dw_forward.1} parent=1 // pred_check
      _
    $region35: #{mlp_dw_forward.1} parent=1 // pred_check_branch
      %348 = sbr.rel (0) target = $region37
    $region36: #{mlp_dw_forward.1} parent=1 // pred_region
      %349 = dma.done [#allocation4], 1024
    $region37: #{mlp_dw_forward.1} parent=1 // pred_fallthru
      _
    %350 = vsyncpa [#allocation3], 1
    %351 = vsyncpa [#allocation6], 1
    %352 = vsyncpa [#allocation4], 1

</llo_original>
